<compile_context>
chip_gen: v7x
topology: tpu7x:2x2x1
jax: 0.10.0
libtpu: 0.0.40
codegen_flags: <defaults>
</compile_context>

<pallas_src>
from functools import partial

import jax
import jax.numpy as jnp
from jax.experimental import pallas as pl
from jax.experimental.pallas import tpu as pltpu


# ---------------------------------------------------------------------------
# Fused path (whole (N, C, HW) slab fits in VMEM): gate + x * gate in one pass.
# ---------------------------------------------------------------------------
def _ca_fused_kernel(x_ref, w1t_ref, w2t_ref, gate_ref, out_ref):
    # x_ref: (N, C, HW)   w1t: (C, hid)   w2t: (hid, C)
    # gate_ref: (N, C)    out_ref: (N, C, HW)
    x = x_ref[...]

    # Pool over the spatial (lane) axis.
    avg = jnp.mean(x, axis=-1)                       # AdaptiveAvgPool2d(1) -> (N, C)
    mx = jnp.max(x, axis=-1)                         # AdaptiveMaxPool2d(1) -> (N, C)

    w1t = w1t_ref[...]
    w2t = w2t_ref[...]

    # Shared MLP applied to avg and max separately (two tiny matmuls beat the
    # concat + sublane-slice relayouts at these shapes).
    # NOTE(v5e micro-opt): with hid this small, fc2 could be a handful of
    # broadcast FMAs on the VPU instead of an MXU push/pop; kept as dots here.
    h_a = jnp.maximum(jnp.dot(avg, w1t, preferred_element_type=jnp.float32), 0.0)
    h_m = jnp.maximum(jnp.dot(mx, w1t, preferred_element_type=jnp.float32), 0.0)
    y = (jnp.dot(h_a, w2t, preferred_element_type=jnp.float32)
         + jnp.dot(h_m, w2t, preferred_element_type=jnp.float32))

    gate = jax.nn.sigmoid(y)                         # (N, C)

    # The (N, C) gate store is masked (C < 128 lanes) but tiny; the fused
    # lane-dense (N, C, HW) store below is the one that matters.
    gate_ref[...] = gate.astype(gate_ref.dtype)
    out_ref[...] = (x * gate[:, :, None]).astype(out_ref.dtype)


def channel_attention(x, w1, w2):
    """Fused CBAM channel attention.

    x:  (N, C, H, W) f32
    w1: (hid, C)  fc1 weight (bias-free 1x1 conv)
    w2: (C, hid)  fc2 weight (bias-free 1x1 conv)

    Returns (gate, gated):
      gate  (N, C, 1, 1) -- exactly the PyTorch module's forward output
      gated (N, C, H, W) -- x * gate, fused in-kernel (x is read from HBM once)
    """
    N, C, H, W = x.shape
    hid = w1.shape[0]
    HW = H * W

    x_flat = x.reshape(N, C, HW)     # spatial axis on lanes
    w1t = w1.T                       # (C, hid)
    w2t = w2.T                       # (hid, C)

    gate, gated = pl.pallas_call(
        _ca_fused_kernel,
        out_shape=(
            jax.ShapeDtypeStruct((N, C), jnp.float32),
            jax.ShapeDtypeStruct((N, C, HW), jnp.float32),
        ),
        grid_spec=pl.GridSpec(
            grid=(1,),
            in_specs=[
                pl.BlockSpec((N, C, HW), lambda i: (0, 0, 0)),   # whole batch
                pl.BlockSpec((C, hid), lambda i: (0, 0)),        # fc1.T (resident)
                pl.BlockSpec((hid, C), lambda i: (0, 0)),        # fc2.T (resident)
            ],
            out_specs=(
                pl.BlockSpec((N, C), lambda i: (0, 0)),          # gate
                pl.BlockSpec((N, C, HW), lambda i: (0, 0, 0)),   # x * gate (lane-dense)
            ),
        ),
        compiler_params=pltpu.CompilerParams(
            dimension_semantics=("arbitrary",)),
    )(x_flat, w1t, w2t)

    return gate.reshape(N, C, 1, 1), gated.reshape(N, C, H, W)


# ---------------------------------------------------------------------------
# Tiled-HW path (production feature maps): gate only, HW-reduction grid axis.
# grid = (N ["parallel" -> both v7x TCs], HW_tiles ["arbitrary", last]).
# Size hw_tile against target VMEM: double-buffered bytes = 2*C*hw_tile*4; keep
# large (>=512 lanes) for HBM-roofline, ~half the v6e choice on v7x / v5e-scoped.
# ---------------------------------------------------------------------------
def _ca_gate_tiled_kernel(x_ref, w1t_ref, w2t_ref, o_ref, sum_acc, max_acc, *,
                          inv_hw):
    # x_ref: (1, C, hw_tile)   o_ref: (1, 1, C)
    # sum_acc / max_acc: (1, C) f32 VMEM scratch (persist across HW tiles)
    k = pl.program_id(1)

    @pl.when(k == 0)
    def _():
        sum_acc[...] = jnp.zeros_like(sum_acc)
        max_acc[...] = jnp.full_like(max_acc, -jnp.inf)

    x = x_ref[...]
    sum_acc[...] += jnp.sum(x, axis=-1)
    max_acc[...] = jnp.maximum(max_acc[...], jnp.max(x, axis=-1))

    @pl.when(k == pl.num_programs(1) - 1)
    def _():
        avg = sum_acc[...] * inv_hw                  # divide by the true HW
        mx = max_acc[...]
        w1t = w1t_ref[...]
        w2t = w2t_ref[...]
        h_a = jnp.maximum(jnp.dot(avg, w1t, preferred_element_type=jnp.float32), 0.0)
        h_m = jnp.maximum(jnp.dot(mx, w1t, preferred_element_type=jnp.float32), 0.0)
        y = (jnp.dot(h_a, w2t, preferred_element_type=jnp.float32)
             + jnp.dot(h_m, w2t, preferred_element_type=jnp.float32))
        o_ref[...] = jax.nn.sigmoid(y)[:, None, :].astype(o_ref.dtype)


def channel_attention_gate_tiled(x, w1, w2, hw_tile=512):
    """Gate-only path for large H*W; returns (N, C, 1, 1)."""
    N, C, H, W = x.shape
    hid = w1.shape[0]
    HW = H * W
    hw_tile = min(hw_tile, HW)
    # TODO(synk): mask partial last HW tiles (-inf for max, zero for sum) to
    # support HW not divisible by hw_tile; the demo picks a divisor.
    assert HW % hw_tile == 0, "tiled path requires HW % hw_tile == 0"

    x_flat = x.reshape(N, C, HW)
    w1t = w1.T
    w2t = w2.T

    gate = pl.pallas_call(
        partial(_ca_gate_tiled_kernel, inv_hw=1.0 / HW),
        out_shape=jax.ShapeDtypeStruct((N, 1, C), jnp.float32),
        grid_spec=pltpu.PrefetchScalarGridSpec(
            num_scalar_prefetch=0,
            grid=(N, HW // hw_tile),
            in_specs=[
                pl.BlockSpec((1, C, hw_tile), lambda i, k: (i, 0, k)),
                pl.BlockSpec((C, hid), lambda i, k: (0, 0)),
                pl.BlockSpec((hid, C), lambda i, k: (0, 0)),
            ],
            out_specs=pl.BlockSpec((1, 1, C), lambda i, k: (i, 0, 0)),
            scratch_shapes=[
                pltpu.VMEM((1, C), jnp.float32),   # running sum
                pltpu.VMEM((1, C), jnp.float32),   # running max
            ],
        ),
        compiler_params=pltpu.CompilerParams(
            dimension_semantics=("parallel", "arbitrary")),
    )(x_flat, w1t, w2t)

    return gate.reshape(N, C, 1, 1)


# ---------------------------------------------------------------------------
# Pure-JAX reference mirroring the PyTorch module.
# ---------------------------------------------------------------------------
def channel_attention_ref(x, w1, w2):
    avg = jnp.mean(x, axis=(2, 3))                  # (N, C)
    mx = jnp.max(x, axis=(2, 3))                    # (N, C)

    def mlp(p):                                     # p: (N, C)
        h = jnp.maximum(p @ w1.T, 0.0)              # (N, hid)
        return h @ w2.T                             # (N, C)

    out = jax.nn.sigmoid(mlp(avg) + mlp(mx))
    return out[:, :, None, None]


if __name__ == "__main__":
    key = jax.random.PRNGKey(0)
    k_x, k_w1, k_w2, k_x2 = jax.random.split(key, 4)

    # Small shapes consistent with the module: in_planes=64, ratio=16 -> hid=4.
    N, C, H, W = 2, 64, 16, 16
    ratio = 16
    hid = C // ratio

    x = jax.random.normal(k_x, (N, C, H, W), dtype=jnp.float32)
    w1 = jax.random.normal(k_w1, (hid, C), dtype=jnp.float32) * (1.0 / jnp.sqrt(C))
    w2 = jax.random.normal(k_w2, (C, hid), dtype=jnp.float32) * (1.0 / jnp.sqrt(hid))

    # --- Fused path: gate (module forward output) + x * gate ---------------
    gate, gated = channel_attention(x, w1, w2)
    jax.block_until_ready((gate, gated))

    gate_ref = channel_attention_ref(x, w1, w2)
    assert gate.shape == (N, C, 1, 1)
    assert gated.shape == (N, C, H, W)
    assert jnp.allclose(gate, gate_ref, atol=1e-5, rtol=1e-5), "gate mismatch"
    assert jnp.allclose(gated, x * gate_ref, atol=1e-5, rtol=1e-5), "gated mismatch"

    # --- Tiled-HW reduction path (pattern for production feature maps) -----
    H2 = W2 = 32                                    # HW = 1024, hw_tile = 512
    x2 = jax.random.normal(k_x2, (N, C, H2, W2), dtype=jnp.float32)
    gate2 = jax.block_until_ready(
        channel_attention_gate_tiled(x2, w1, w2, hw_tile=512))
    gate2_ref = channel_attention_ref(x2, w1, w2)
    assert jnp.allclose(gate2, gate2_ref, atol=1e-5, rtol=1e-5), "tiled gate mismatch"

    print("KERNEL_OK")
</pallas_src>

<mosaic_0001>
module attributes {stable_mosaic.version = 11 : i64} {
  func.func @_ca_fused_kernel(%arg0: i32, %arg1: memref<2x64x256xf32, #tpu.memory_space<vmem>>, %arg2: memref<64x4xf32, #tpu.memory_space<vmem>>, %arg3: memref<4x64xf32, #tpu.memory_space<vmem>>, %arg4: memref<2x64xf32, #tpu.memory_space<vmem>>, %arg5: memref<2x64x256xf32, #tpu.memory_space<vmem>>) attributes {dimension_semantics = [#tpu.dimension_semantics<arbitrary>], iteration_bounds = array<i64: 1>, scalar_prefetch = 0 : i64, scratch_operands = 0 : i64, tpu.core_type = #tpu.core_type<tc>, window_params = [{pipeline_mode = #tpu.pipeline_mode<synchronous>, transform_indices = @transform_0, window_bounds = array<i64: 2, 64, 256>}, {pipeline_mode = #tpu.pipeline_mode<synchronous>, transform_indices = @transform_1, window_bounds = array<i64: 64, 4>}, {pipeline_mode = #tpu.pipeline_mode<synchronous>, transform_indices = @transform_2, window_bounds = array<i64: 4, 64>}, {pipeline_mode = #tpu.pipeline_mode<synchronous>, transform_indices = @transform_3, window_bounds = array<i64: 2, 64>}, {pipeline_mode = #tpu.pipeline_mode<synchronous>, transform_indices = @transform_4, window_bounds = array<i64: 2, 64, 256>}]} {
    %c0 = arith.constant 0 : index
    %c0_0 = arith.constant 0 : index
    %c0_1 = arith.constant 0 : index
    %0 = vector.load %arg1[%c0, %c0_0, %c0_1] : memref<2x64x256xf32, #tpu.memory_space<vmem>>, vector<2x64x256xf32>
    %cst = arith.constant dense<0.000000e+00> : vector<2x64xf32>
    %1 = vector.multi_reduction <add>, %0, %cst [2] : vector<2x64x256xf32> to vector<2x64xf32>
    %cst_2 = arith.constant 2.560000e+02 : f32
    %2 = vector.broadcast %cst_2 : f32 to vector<2x64xf32>
    %3 = arith.divf %1, %2 : vector<2x64xf32>
    %cst_3 = arith.constant dense<0xFF800000> : vector<2x64xf32>
    %4 = vector.multi_reduction <maximumf>, %0, %cst_3 [2] : vector<2x64x256xf32> to vector<2x64xf32>
    %c0_4 = arith.constant 0 : index
    %c0_5 = arith.constant 0 : index
    %5 = vector.load %arg2[%c0_4, %c0_5] : memref<64x4xf32, #tpu.memory_space<vmem>>, vector<64x4xf32>
    %c0_6 = arith.constant 0 : index
    %c0_7 = arith.constant 0 : index
    %6 = vector.load %arg3[%c0_6, %c0_7] : memref<4x64xf32, #tpu.memory_space<vmem>>, vector<4x64xf32>
    %cst_8 = arith.constant dense<0.000000e+00> : vector<2x4xf32>
    %7 = tpu.matmul %3, %5, %cst_8 {dimension_numbers = #tpu.dot_dimension_numbers<[1], [0], [0], [1], [0, 0, 1, 1], [], []>} : vector<2x64xf32>, vector<64x4xf32>, vector<2x4xf32> -> vector<2x4xf32>
    %cst_9 = arith.constant 0.000000e+00 : f32
    %8 = vector.broadcast %cst_9 : f32 to vector<2x4xf32>
    %9 = arith.maximumf %7, %8 : vector<2x4xf32>
    %cst_10 = arith.constant dense<0.000000e+00> : vector<2x4xf32>
    %10 = tpu.matmul %4, %5, %cst_10 {dimension_numbers = #tpu.dot_dimension_numbers<[1], [0], [0], [1], [0, 0, 1, 1], [], []>} : vector<2x64xf32>, vector<64x4xf32>, vector<2x4xf32> -> vector<2x4xf32>
    %cst_11 = arith.constant 0.000000e+00 : f32
    %11 = vector.broadcast %cst_11 : f32 to vector<2x4xf32>
    %12 = arith.maximumf %10, %11 : vector<2x4xf32>
    %cst_12 = arith.constant dense<0.000000e+00> : vector<2x64xf32>
    %13 = tpu.matmul %9, %6, %cst_12 {dimension_numbers = #tpu.dot_dimension_numbers<[1], [0], [0], [1], [0, 0, 1, 1], [], []>} : vector<2x4xf32>, vector<4x64xf32>, vector<2x64xf32> -> vector<2x64xf32>
    %cst_13 = arith.constant dense<0.000000e+00> : vector<2x64xf32>
    %14 = tpu.matmul %12, %6, %cst_13 {dimension_numbers = #tpu.dot_dimension_numbers<[1], [0], [0], [1], [0, 0, 1, 1], [], []>} : vector<2x4xf32>, vector<4x64xf32>, vector<2x64xf32> -> vector<2x64xf32>
    %15 = arith.addf %13, %14 : vector<2x64xf32>
    %16 = arith.negf %15 : vector<2x64xf32>
    %17 = math.exp %16 : vector<2x64xf32>
    %cst_14 = arith.constant 1.000000e+00 : f32
    %18 = vector.broadcast %cst_14 : f32 to vector<2x64xf32>
    %19 = arith.addf %18, %17 : vector<2x64xf32>
    %20 = arith.divf %18, %19 : vector<2x64xf32>
    %c0_15 = arith.constant 0 : index
    %c0_16 = arith.constant 0 : index
    %21 = vector.load %arg4[%c0_15, %c0_16] : memref<2x64xf32, #tpu.memory_space<vmem>>, vector<2x64xf32>
    tpu.vector_store %arg4[%c0_15, %c0_16], %20 {strides = array<i32>} : memref<2x64xf32, #tpu.memory_space<vmem>>, vector<2x64xf32>,
    %22 = vector.shape_cast %20 : vector<2x64xf32> to vector<2x64x1xf32>
    %23 = vector.broadcast %22 : vector<2x64x1xf32> to vector<2x64x256xf32>
    %24 = arith.mulf %0, %23 : vector<2x64x256xf32>
    %c0_17 = arith.constant 0 : index
    %c0_18 = arith.constant 0 : index
    %c0_19 = arith.constant 0 : index
    %25 = vector.load %arg5[%c0_17, %c0_18, %c0_19] : memref<2x64x256xf32, #tpu.memory_space<vmem>>, vector<2x64x256xf32>
    tpu.vector_store %arg5[%c0_17, %c0_18, %c0_19], %24 {strides = array<i32>} : memref<2x64x256xf32, #tpu.memory_space<vmem>>, vector<2x64x256xf32>,
    return
  }
  func.func @transform_0(%arg0: i32) -> (i32, i32, i32) {
    %c0_i32 = arith.constant 0 : i32
    %c0_i32_0 = arith.constant 0 : i32
    %c0_i32_1 = arith.constant 0 : i32
    %c0_i32_2 = arith.constant 0 : i32
    return %c0_i32, %c0_i32_0, %c0_i32_1 : i32, i32, i32
  }
  func.func @transform_1(%arg0: i32) -> (i32, i32) {
    %c0_i32 = arith.constant 0 : i32
    %c0_i32_0 = arith.constant 0 : i32
    %c0_i32_1 = arith.constant 0 : i32
    return %c0_i32, %c0_i32_0 : i32, i32
  }
  func.func @transform_2(%arg0: i32) -> (i32, i32) {
    %c0_i32 = arith.constant 0 : i32
    %c0_i32_0 = arith.constant 0 : i32
    %c0_i32_1 = arith.constant 0 : i32
    return %c0_i32, %c0_i32_0 : i32, i32
  }
  func.func @transform_3(%arg0: i32) -> (i32, i32) {
    %c0_i32 = arith.constant 0 : i32
    %c0_i32_0 = arith.constant 0 : i32
    %c0_i32_1 = arith.constant 0 : i32
    return %c0_i32, %c0_i32_0 : i32, i32
  }
  func.func @transform_4(%arg0: i32) -> (i32, i32, i32) {
    %c0_i32 = arith.constant 0 : i32
    %c0_i32_0 = arith.constant 0 : i32
    %c0_i32_1 = arith.constant 0 : i32
    %c0_i32_2 = arith.constant 0 : i32
    return %c0_i32, %c0_i32_0, %c0_i32_1 : i32, i32, i32
  }
}

</mosaic_0001>

<llo_original>
// kernel: tpu_custom_call.1
$region0: #{tpu_custom_call.1}
  #allocation0 [shape = 'u32[]', space=smem, size = 0x4, offset = 0x4, fixed_abs, tag = 'smem constant byte address 0x4 - core index']
  #allocation1 [shape = 'u32[144,128]{1,0:T(1,128)}', space=vmem, size = 0x12000, scoped, tag = 'internal scratch']
  %s0 = inlined_call_operand.hbm [shape: f32[2,64,256], index: 0, kind: input, shape index: {}]
  %s1 = inlined_call_operand.vmem [shape: f32[64,4], index: 1, kind: input, shape index: {}]
  %s2 = inlined_call_operand.vmem [shape: f32[4,64], index: 2, kind: input, shape index: {}]
  %s3 = inlined_call_operand.hbm [shape: f32[2,64], index: 3, kind: output, shape index: {0}]
  %s4 = inlined_call_operand.hbm [shape: f32[2,64,256], index: 4, kind: output, shape index: {1}]
  %5 = xla_tuple %s3, %s4
  %s6 = sld [smem:[#allocation0]]
  $region34: #{tpu_custom_call.1} parent=0
    _
  %s8 = ssub.s32 1, %s6
  %s9 = scalar_select 0, %s8, %s6
  $region1: #{tpu_custom_call.1} parent=0
    #allocation2 [shape = 'u8[131072]{0}', space=vmem, size = 0x20000, scoped, tag = 'input window, operand 0, single buffered']
    #allocation3 [shape = 's32[1]{0}', space=sflag, size = 0x4, scoped, tag = 'scoped memory for tpu_custom_call.1']
    #allocation4 [shape = 's32[1]{0}', space=sflag, size = 0x4, scoped, tag = 'scoped memory for tpu_custom_call.1']
    #allocation5 [shape = 'u8[1024]{0}', space=vmem, size = 0x400, scoped, tag = 'output window, operand 0, single buffered']
    #allocation6 [shape = 'u8[131072]{0}', space=vmem, size = 0x20000, scoped, tag = 'output window, operand 1, single buffered']
    #allocation7 [shape = 's32[1]{0}', space=sflag, size = 0x4, scoped, tag = 'scoped memory for tpu_custom_call.1']
    %10 = vsyncpa [#allocation3], 0
    %11 = vsyncpa [#allocation4], 0
    %12 = vsyncpa [#allocation7], 0
    // Predicated region
    $region2: #{tpu_custom_call.1} parent=1 // pred_check
      _
    $region3: #{tpu_custom_call.1} parent=1 // pred_check_branch
      %14 = sbr.rel (0) target = $region5
    $region4: #{tpu_custom_call.1} parent=1 // pred_region
      %s16 = ssub.s32 4096, 4096
      %17 = vsyncadd [#allocation3], %s16
      %s18 = sshll.u32 [#allocation2], 4
      %s19 = int_to_ptr.vmem [resolvable:$true] %s18
      %24 = dma.hbm_to_vmem [thread:$0]  %s0, 4096, %s19, [#allocation3], 256, 256, 16
    $region5: #{tpu_custom_call.1} parent=1 // pred_fallthru
      _
    // Predicated region
    $region6: #{tpu_custom_call.1} parent=1 // pred_check
      _
    $region7: #{tpu_custom_call.1} parent=1 // pred_check_branch
      %26 = sbr.rel (0) target = $region9
    $region8: #{tpu_custom_call.1} parent=1 // pred_region
      _
    $region9: #{tpu_custom_call.1} parent=1 // pred_fallthru
      _
    // Predicated region
    $region10: #{tpu_custom_call.1} parent=1 // pred_check
      _
    $region11: #{tpu_custom_call.1} parent=1 // pred_check_branch
      %28 = sbr.rel (0) target = $region13
    $region12: #{tpu_custom_call.1} parent=1 // pred_region
      _
    $region13: #{tpu_custom_call.1} parent=1 // pred_fallthru
      _
    // Predicated region
    $region14: #{tpu_custom_call.1} parent=1 // pred_check
      _
    $region15: #{tpu_custom_call.1} parent=1 // pred_check_branch
      %30 = sbr.rel (0) target = $region17
    $region16: #{tpu_custom_call.1} parent=1 // pred_region
      %31 = dma.done [#allocation3], 4096
    $region17: #{tpu_custom_call.1} parent=1 // pred_fallthru
      _
    %v32 = vld [vmem:[#allocation2] sm:$0xff]
    %v33 = vld [vmem:[#allocation2 + $0x8] sm:$0xff]
    %v34 = vld [vmem:[#allocation2 + $0x10] sm:$0xff]
    %v35 = vld [vmem:[#allocation2 + $0x18] sm:$0xff]
    %v36 = vld [vmem:[#allocation2 + $0x20] sm:$0xff]
    %v37 = vld [vmem:[#allocation2 + $0x28] sm:$0xff]
    %v38 = vld [vmem:[#allocation2 + $0x30] sm:$0xff]
    %v39 = vld [vmem:[#allocation2 + $0x38] sm:$0xff]
    %v40 = vld [vmem:[#allocation2 + $0x40] sm:$0xff]
    %v41 = vld [vmem:[#allocation2 + $0x48] sm:$0xff]
    %v42 = vld [vmem:[#allocation2 + $0x50] sm:$0xff]
    %v43 = vld [vmem:[#allocation2 + $0x58] sm:$0xff]
    %v44 = vld [vmem:[#allocation2 + $0x60] sm:$0xff]
    %v45 = vld [vmem:[#allocation2 + $0x68] sm:$0xff]
    %v46 = vld [vmem:[#allocation2 + $0x70] sm:$0xff]
    %v47 = vld [vmem:[#allocation2 + $0x78] sm:$0xff]
    %v48 = vld [vmem:[#allocation2 + $0x80] sm:$0xff]
    %v49 = vld [vmem:[#allocation2 + $0x88] sm:$0xff]
    %v50 = vld [vmem:[#allocation2 + $0x90] sm:$0xff]
    %v51 = vld [vmem:[#allocation2 + $0x98] sm:$0xff]
    %v52 = vld [vmem:[#allocation2 + $0xa0] sm:$0xff]
    %v53 = vld [vmem:[#allocation2 + $0xa8] sm:$0xff]
    %v54 = vld [vmem:[#allocation2 + $0xb0] sm:$0xff]
    %v55 = vld [vmem:[#allocation2 + $0xb8] sm:$0xff]
    %v56 = vld [vmem:[#allocation2 + $0xc0] sm:$0xff]
    %v57 = vld [vmem:[#allocation2 + $0xc8] sm:$0xff]
    %v58 = vld [vmem:[#allocation2 + $0xd0] sm:$0xff]
    %v59 = vld [vmem:[#allocation2 + $0xd8] sm:$0xff]
    %v60 = vld [vmem:[#allocation2 + $0xe0] sm:$0xff]
    %v61 = vld [vmem:[#allocation2 + $0xe8] sm:$0xff]
    %v62 = vld [vmem:[#allocation2 + $0xf0] sm:$0xff]
    %v63 = vld [vmem:[#allocation2 + $0xf8] sm:$0xff]
    %v64 = vadd.f32 %v32, %v33
    %65 = vadd.xlane.f32.xlu0 %v64
    %v66 = vpop.xlane.xlu0 %65
    %v67 = vadd.f32 %v34, %v35
    %68 = vadd.xlane.f32.xlu0 %v67
    %v69 = vpop.xlane.xlu0 %68
    %v70 = vadd.f32 %v36, %v37
    %71 = vadd.xlane.f32.xlu0 %v70
    %v72 = vpop.xlane.xlu0 %71
    %v73 = vadd.f32 %v38, %v39
    %74 = vadd.xlane.f32.xlu0 %v73
    %v75 = vpop.xlane.xlu0 %74
    %v76 = vadd.f32 %v40, %v41
    %77 = vadd.xlane.f32.xlu0 %v76
    %v78 = vpop.xlane.xlu0 %77
    %v79 = vadd.f32 %v42, %v43
    %80 = vadd.xlane.f32.xlu0 %v79
    %v81 = vpop.xlane.xlu0 %80
    %v82 = vadd.f32 %v44, %v45
    %83 = vadd.xlane.f32.xlu0 %v82
    %v84 = vpop.xlane.xlu0 %83
    %v85 = vadd.f32 %v46, %v47
    %86 = vadd.xlane.f32.xlu0 %v85
    %v87 = vpop.xlane.xlu0 %86
    %v88 = vadd.f32 %v48, %v49
    %89 = vadd.xlane.f32.xlu0 %v88
    %v90 = vpop.xlane.xlu0 %89
    %v91 = vadd.f32 %v50, %v51
    %92 = vadd.xlane.f32.xlu0 %v91
    %v93 = vpop.xlane.xlu0 %92
    %v94 = vadd.f32 %v52, %v53
    %95 = vadd.xlane.f32.xlu0 %v94
    %v96 = vpop.xlane.xlu0 %95
    %v97 = vadd.f32 %v54, %v55
    %98 = vadd.xlane.f32.xlu0 %v97
    %v99 = vpop.xlane.xlu0 %98
    %v100 = vadd.f32 %v56, %v57
    %101 = vadd.xlane.f32.xlu0 %v100
    %v102 = vpop.xlane.xlu0 %101
    %v103 = vadd.f32 %v58, %v59
    %104 = vadd.xlane.f32.xlu0 %v103
    %v105 = vpop.xlane.xlu0 %104
    %v106 = vadd.f32 %v60, %v61
    %107 = vadd.xlane.f32.xlu0 %v106
    %v108 = vpop.xlane.xlu0 %107
    %v109 = vadd.f32 %v62, %v63
    %110 = vadd.xlane.f32.xlu0 %v109
    %v111 = vpop.xlane.xlu0 %110
    %v112 = vrcp.pop 256.0
    %v113 = vmul.f32 %v66, %v112
    %v114 = vmul.f32 %v69, %v112
    %v115 = vmul.f32 %v72, %v112
    %v116 = vmul.f32 %v75, %v112
    %v117 = vmul.f32 %v78, %v112
    %v118 = vmul.f32 %v81, %v112
    %v119 = vmul.f32 %v84, %v112
    %v120 = vmul.f32 %v87, %v112
    %v121 = vmul.f32 %v90, %v112
    %v122 = vmul.f32 %v93, %v112
    %v123 = vmul.f32 %v96, %v112
    %v124 = vmul.f32 %v99, %v112
    %v125 = vmul.f32 %v102, %v112
    %v126 = vmul.f32 %v105, %v112
    %v127 = vmul.f32 %v108, %v112
    %v128 = vmul.f32 %v111, %v112
    %v129 = vmax.f32 %v32, %v33
    %130 = vmax.xlane.f32.xlu0 %v129
    %v131 = vpop.xlane.xlu0 %130
    %v132 = vmax.f32 %v34, %v35
    %133 = vmax.xlane.f32.xlu0 %v132
    %v134 = vpop.xlane.xlu0 %133
    %v135 = vmax.f32 %v36, %v37
    %136 = vmax.xlane.f32.xlu0 %v135
    %v137 = vpop.xlane.xlu0 %136
    %v138 = vmax.f32 %v38, %v39
    %139 = vmax.xlane.f32.xlu0 %v138
    %v140 = vpop.xlane.xlu0 %139
    %v141 = vmax.f32 %v40, %v41
    %142 = vmax.xlane.f32.xlu0 %v141
    %v143 = vpop.xlane.xlu0 %142
    %v144 = vmax.f32 %v42, %v43
    %145 = vmax.xlane.f32.xlu0 %v144
    %v146 = vpop.xlane.xlu0 %145
    %v147 = vmax.f32 %v44, %v45
    %148 = vmax.xlane.f32.xlu0 %v147
    %v149 = vpop.xlane.xlu0 %148
    %v150 = vmax.f32 %v46, %v47
    %151 = vmax.xlane.f32.xlu0 %v150
    %v152 = vpop.xlane.xlu0 %151
    %v153 = vmax.f32 %v48, %v49
    %154 = vmax.xlane.f32.xlu0 %v153
    %v155 = vpop.xlane.xlu0 %154
    %v156 = vmax.f32 %v50, %v51
    %157 = vmax.xlane.f32.xlu0 %v156
    %v158 = vpop.xlane.xlu0 %157
    %v159 = vmax.f32 %v52, %v53
    %160 = vmax.xlane.f32.xlu0 %v159
    %v161 = vpop.xlane.xlu0 %160
    %v162 = vmax.f32 %v54, %v55
    %163 = vmax.xlane.f32.xlu0 %v162
    %v164 = vpop.xlane.xlu0 %163
    %v165 = vmax.f32 %v56, %v57
    %166 = vmax.xlane.f32.xlu0 %v165
    %v167 = vpop.xlane.xlu0 %166
    %v168 = vmax.f32 %v58, %v59
    %169 = vmax.xlane.f32.xlu0 %v168
    %v170 = vpop.xlane.xlu0 %169
    %v171 = vmax.f32 %v60, %v61
    %172 = vmax.xlane.f32.xlu0 %v171
    %v173 = vpop.xlane.xlu0 %172
    %v174 = vmax.f32 %v62, %v63
    %175 = vmax.xlane.f32.xlu0 %v174
    %v176 = vpop.xlane.xlu0 %175
    %v177 = vld [vmem:[%s1] sm:$0xff]
    %v178 = vld [vmem:[%s1 + $0x8] sm:$0xff]
    %v179 = vld [vmem:[%s1 + $0x10] sm:$0xff]
    %v180 = vld [vmem:[%s1 + $0x18] sm:$0xff]
    %v181 = vld [vmem:[%s1 + $0x20] sm:$0xff]
    %v182 = vld [vmem:[%s1 + $0x28] sm:$0xff]
    %v183 = vld [vmem:[%s1 + $0x30] sm:$0xff]
    %v184 = vld [vmem:[%s1 + $0x38] sm:$0xff]
    %v185 = vld [vmem:[%s2] sm:$0xf]
    %v202 = vlaneseq
    %v203 = vand.u32 %v202, 127
    %v204 = vlaneseq
    %v205 = vshrl.u32 %v204, 7
    %v206 = vsub.s32 %v203, %v205
    %v207 = vrot.slane %v113, %v206
    %v208 = vadd.s32 %v203, 4294967288
    %v209 = vlaneseq
    %v210 = vshrl.u32 %v209, 7
    %v211 = vsub.s32 %v208, %v210
    %v212 = vrot.slane %v114, %v211
    %vm213 = vcmask 130112
    %v214 = vsel %vm213, %v212, %v207
    %v215 = vadd.s32 %v203, 4294967280
    %v216 = vlaneseq
    %v217 = vshrl.u32 %v216, 7
    %v218 = vsub.s32 %v215, %v217
    %v219 = vrot.slane %v115, %v218
    %vm220 = vcmask 195712
    %v221 = vsel %vm220, %v219, %v214
    %v222 = vadd.s32 %v203, 4294967272
    %v223 = vlaneseq
    %v224 = vshrl.u32 %v223, 7
    %v225 = vsub.s32 %v222, %v224
    %v226 = vrot.slane %v116, %v225
    %vm227 = vcmask 261312
    %v228 = vsel %vm227, %v226, %v221
    %v229 = vadd.s32 %v203, 4294967264
    %v230 = vlaneseq
    %v231 = vshrl.u32 %v230, 7
    %v232 = vsub.s32 %v229, %v231
    %v233 = vrot.slane %v117, %v232
    %vm234 = vcmask 326912
    %v235 = vsel %vm234, %v233, %v228
    %v236 = vadd.s32 %v203, 4294967256
    %v237 = vlaneseq
    %v238 = vshrl.u32 %v237, 7
    %v239 = vsub.s32 %v236, %v238
    %v240 = vrot.slane %v118, %v239
    %vm241 = vcmask 392512
    %v242 = vsel %vm241, %v240, %v235
    %v243 = vadd.s32 %v203, 4294967248
    %v244 = vlaneseq
    %v245 = vshrl.u32 %v244, 7
    %v246 = vsub.s32 %v243, %v245
    %v247 = vrot.slane %v119, %v246
    %vm248 = vcmask 458112
    %v249 = vsel %vm248, %v247, %v242
    %v250 = vadd.s32 %v203, 4294967240
    %v251 = vlaneseq
    %v252 = vshrl.u32 %v251, 7
    %v253 = vsub.s32 %v250, %v252
    %v254 = vrot.slane %v120, %v253
    %vm255 = vcmask 523712
    %v256 = vsel %vm255, %v254, %v249
    %v257 = vlaneseq
    %v258 = vshrl.u32 %v257, 7
    %v259 = vsub.s32 %v203, %v258
    %v260 = vrot.slane %v121, %v259
    %v261 = vlaneseq
    %v262 = vshrl.u32 %v261, 7
    %v263 = vsub.s32 %v208, %v262
    %v264 = vrot.slane %v122, %v263
    %v265 = vsel %vm213, %v264, %v260
    %v266 = vlaneseq
    %v267 = vshrl.u32 %v266, 7
    %v268 = vsub.s32 %v215, %v267
    %v269 = vrot.slane %v123, %v268
    %v270 = vsel %vm220, %v269, %v265
    %v271 = vlaneseq
    %v272 = vshrl.u32 %v271, 7
    %v273 = vsub.s32 %v222, %v272
    %v274 = vrot.slane %v124, %v273
    %v275 = vsel %vm227, %v274, %v270
    %v276 = vlaneseq
    %v277 = vshrl.u32 %v276, 7
    %v278 = vsub.s32 %v229, %v277
    %v279 = vrot.slane %v125, %v278
    %v280 = vsel %vm234, %v279, %v275
    %v281 = vlaneseq
    %v282 = vshrl.u32 %v281, 7
    %v283 = vsub.s32 %v236, %v282
    %v284 = vrot.slane %v126, %v283
    %v285 = vsel %vm241, %v284, %v280
    %v286 = vlaneseq
    %v287 = vshrl.u32 %v286, 7
    %v288 = vsub.s32 %v243, %v287
    %v289 = vrot.slane %v127, %v288
    %v290 = vsel %vm248, %v289, %v285
    %v291 = vlaneseq
    %v292 = vshrl.u32 %v291, 7
    %v293 = vsub.s32 %v250, %v292
    %v294 = vrot.slane %v128, %v293
    %v295 = vsel %vm255, %v294, %v290
    %vm296 = vcmask 1041409
    %v297 = vsel %vm296, %v295, %v256
    %vm298 = vcmask 523264
    %v299 = vsel %vm298, %v297, 0
    %301 = vmatprep.subr.mxu0 0.0
    %302 = vmatpush1.msra.mxu0 %v177
    %303 = vmatprep.subr.mxu0 0.0
    %304 = vmatpush1.msra.mxu0 %v178
    %305 = vmatprep.subr.mxu0 0.0
    %306 = vmatpush1.msra.mxu0 %v179
    %307 = vmatprep.subr.mxu0 0.0
    %308 = vmatpush1.msra.mxu0 %v180
    %309 = vmatprep.subr.mxu0 0.0
    %310 = vmatpush1.msra.mxu0 %v181
    %311 = vmatprep.subr.mxu0 0.0
    %312 = vmatpush1.msra.mxu0 %v182
    %313 = vmatprep.subr.mxu0 0.0
    %314 = vmatpush1.msra.mxu0 %v183
    %315 = vmatprep.subr.mxu0 0.0
    %316 = vmatpush1.msra.mxu0 %v184
    %317 = vmatprep.subr.mxu0 0.0
    %318 = vmatpush1.msra.mxu0 0.0
    %319 = vmatprep.subr.mxu0 0.0
    %320 = vmatpush1.msra.mxu0 0.0
    %321 = vmatprep.subr.mxu0 0.0
    %322 = vmatpush1.msra.mxu0 0.0
    %323 = vmatprep.subr.mxu0 0.0
    %324 = vmatpush1.msra.mxu0 0.0
    %325 = vmatprep.subr.mxu0 0.0
    %326 = vmatpush1.msra.mxu0 0.0
    %327 = vmatprep.subr.mxu0 0.0
    %328 = vmatpush1.msra.mxu0 0.0
    %329 = vmatprep.subr.mxu0 0.0
    %330 = vmatpush1.msra.mxu0 0.0
    %331 = vmatprep.subr.mxu0 0.0
    %332 = vmatpush1.msra.mxu0 0.0
    %333 = vmatprep.subr.mxu0 0.0
    %334 = vmatpush1.msra.mxu0 0.0
    %335 = vmatprep.subr.mxu0 0.0
    %336 = vmatpush1.msra.mxu0 0.0
    %337 = vmatprep.subr.mxu0 0.0
    %338 = vmatpush1.msra.mxu0 0.0
    %339 = vmatprep.subr.mxu0 0.0
    %340 = vmatpush1.msra.mxu0 0.0
    %341 = vmatprep.subr.mxu0 0.0
    %342 = vmatpush1.msra.mxu0 0.0
    %343 = vmatprep.subr.mxu0 0.0
    %344 = vmatpush1.msra.mxu0 0.0
    %345 = vmatprep.subr.mxu0 0.0
    %346 = vmatpush1.msra.mxu0 0.0
    %347 = vmatprep.subr.mxu0 0.0
    %348 = vmatpush1.msra.mxu0 0.0
    %349 = vmatprep.subr.mxu0 0.0
    %350 = vmatpush1.msra.mxu0 0.0
    %351 = vmatprep.subr.mxu0 0.0
    %352 = vmatpush1.msra.mxu0 0.0
    %353 = vmatprep.subr.mxu0 0.0
    %354 = vmatpush1.msra.mxu0 0.0
    %355 = vmatprep.subr.mxu0 0.0
    %356 = vmatpush1.msra.mxu0 0.0
    %357 = vmatprep.subr.mxu0 0.0
    %358 = vmatpush1.msra.mxu0 0.0
    %359 = vmatprep.subr.mxu0 0.0
    %360 = vmatpush1.msra.mxu0 0.0
    %361 = vmatprep.subr.mxu0 0.0
    %362 = vmatpush1.msra.mxu0 0.0
    %363 = vmatprep.subr.mxu0 0.0
    %364 = vmatpush1.msra.mxu0 0.0
    %365 = vmatprep.mubr.f32.mxu0 0.0
    %366 = vmatmul.mubr.f32.gmra.mrb[0].mxu0 %v299
    %v367 = vpop.f32.mrb[0].mxu0
    %v368 = vadd.f32 0.0, %v367
    %v369 = vpop.f32.mrb[0].mxu0
    %370 = vdwg.mxu0
    %v371 = vmax.f32 %v368, 0.0
    %v388 = vlaneseq
    %v389 = vshrl.u32 %v388, 7
    %v390 = vsub.s32 %v203, %v389
    %v391 = vrot.slane %v131, %v390
    %v392 = vlaneseq
    %v393 = vshrl.u32 %v392, 7
    %v394 = vsub.s32 %v208, %v393
    %v395 = vrot.slane %v134, %v394
    %v396 = vsel %vm213, %v395, %v391
    %v397 = vlaneseq
    %v398 = vshrl.u32 %v397, 7
    %v399 = vsub.s32 %v215, %v398
    %v400 = vrot.slane %v137, %v399
    %v401 = vsel %vm220, %v400, %v396
    %v402 = vlaneseq
    %v403 = vshrl.u32 %v402, 7
    %v404 = vsub.s32 %v222, %v403
    %v405 = vrot.slane %v140, %v404
    %v406 = vsel %vm227, %v405, %v401
    %v407 = vlaneseq
    %v408 = vshrl.u32 %v407, 7
    %v409 = vsub.s32 %v229, %v408
    %v410 = vrot.slane %v143, %v409
    %v411 = vsel %vm234, %v410, %v406
    %v412 = vlaneseq
    %v413 = vshrl.u32 %v412, 7
    %v414 = vsub.s32 %v236, %v413
    %v415 = vrot.slane %v146, %v414
    %v416 = vsel %vm241, %v415, %v411
    %v417 = vlaneseq
    %v418 = vshrl.u32 %v417, 7
    %v419 = vsub.s32 %v243, %v418
    %v420 = vrot.slane %v149, %v419
    %v421 = vsel %vm248, %v420, %v416
    %v422 = vlaneseq
    %v423 = vshrl.u32 %v422, 7
    %v424 = vsub.s32 %v250, %v423
    %v425 = vrot.slane %v152, %v424
    %v426 = vsel %vm255, %v425, %v421
    %v427 = vlaneseq
    %v428 = vshrl.u32 %v427, 7
    %v429 = vsub.s32 %v203, %v428
    %v430 = vrot.slane %v155, %v429
    %v431 = vlaneseq
    %v432 = vshrl.u32 %v431, 7
    %v433 = vsub.s32 %v208, %v432
    %v434 = vrot.slane %v158, %v433
    %v435 = vsel %vm213, %v434, %v430
    %v436 = vlaneseq
    %v437 = vshrl.u32 %v436, 7
    %v438 = vsub.s32 %v215, %v437
    %v439 = vrot.slane %v161, %v438
    %v440 = vsel %vm220, %v439, %v435
    %v441 = vlaneseq
    %v442 = vshrl.u32 %v441, 7
    %v443 = vsub.s32 %v222, %v442
    %v444 = vrot.slane %v164, %v443
    %v445 = vsel %vm227, %v444, %v440
    %v446 = vlaneseq
    %v447 = vshrl.u32 %v446, 7
    %v448 = vsub.s32 %v229, %v447
    %v449 = vrot.slane %v167, %v448
    %v450 = vsel %vm234, %v449, %v445
    %v451 = vlaneseq
    %v452 = vshrl.u32 %v451, 7
    %v453 = vsub.s32 %v236, %v452
    %v454 = vrot.slane %v170, %v453
    %v455 = vsel %vm241, %v454, %v450
    %v456 = vlaneseq
    %v457 = vshrl.u32 %v456, 7
    %v458 = vsub.s32 %v243, %v457
    %v459 = vrot.slane %v173, %v458
    %v460 = vsel %vm248, %v459, %v455
    %v461 = vlaneseq
    %v462 = vshrl.u32 %v461, 7
    %v463 = vsub.s32 %v250, %v462
    %v464 = vrot.slane %v176, %v463
    %v465 = vsel %vm255, %v464, %v460
    %v466 = vsel %vm296, %v465, %v426
    %v467 = vsel %vm298, %v466, 0
    %469 = vmatprep.subr.mxu0 0.0
    %470 = vmatpush1.msra.mxu0 %v177
    %471 = vmatprep.subr.mxu0 0.0
    %472 = vmatpush1.msra.mxu0 %v178
    %473 = vmatprep.subr.mxu0 0.0
    %474 = vmatpush1.msra.mxu0 %v179
    %475 = vmatprep.subr.mxu0 0.0
    %476 = vmatpush1.msra.mxu0 %v180
    %477 = vmatprep.subr.mxu0 0.0
    %478 = vmatpush1.msra.mxu0 %v181
    %479 = vmatprep.subr.mxu0 0.0
    %480 = vmatpush1.msra.mxu0 %v182
    %481 = vmatprep.subr.mxu0 0.0
    %482 = vmatpush1.msra.mxu0 %v183
    %483 = vmatprep.subr.mxu0 0.0
    %484 = vmatpush1.msra.mxu0 %v184
    %485 = vmatprep.subr.mxu0 0.0
    %486 = vmatpush1.msra.mxu0 0.0
    %487 = vmatprep.subr.mxu0 0.0
    %488 = vmatpush1.msra.mxu0 0.0
    %489 = vmatprep.subr.mxu0 0.0
    %490 = vmatpush1.msra.mxu0 0.0
    %491 = vmatprep.subr.mxu0 0.0
    %492 = vmatpush1.msra.mxu0 0.0
    %493 = vmatprep.subr.mxu0 0.0
    %494 = vmatpush1.msra.mxu0 0.0
    %495 = vmatprep.subr.mxu0 0.0
    %496 = vmatpush1.msra.mxu0 0.0
    %497 = vmatprep.subr.mxu0 0.0
    %498 = vmatpush1.msra.mxu0 0.0
    %499 = vmatprep.subr.mxu0 0.0
    %500 = vmatpush1.msra.mxu0 0.0
    %501 = vmatprep.subr.mxu0 0.0
    %502 = vmatpush1.msra.mxu0 0.0
    %503 = vmatprep.subr.mxu0 0.0
    %504 = vmatpush1.msra.mxu0 0.0
    %505 = vmatprep.subr.mxu0 0.0
    %506 = vmatpush1.msra.mxu0 0.0
    %507 = vmatprep.subr.mxu0 0.0
    %508 = vmatpush1.msra.mxu0 0.0
    %509 = vmatprep.subr.mxu0 0.0
    %510 = vmatpush1.msra.mxu0 0.0
    %511 = vmatprep.subr.mxu0 0.0
    %512 = vmatpush1.msra.mxu0 0.0
    %513 = vmatprep.subr.mxu0 0.0
    %514 = vmatpush1.msra.mxu0 0.0
    %515 = vmatprep.subr.mxu0 0.0
    %516 = vmatpush1.msra.mxu0 0.0
    %517 = vmatprep.subr.mxu0 0.0
    %518 = vmatpush1.msra.mxu0 0.0
    %519 = vmatprep.subr.mxu0 0.0
    %520 = vmatpush1.msra.mxu0 0.0
    %521 = vmatprep.subr.mxu0 0.0
    %522 = vmatpush1.msra.mxu0 0.0
    %523 = vmatprep.subr.mxu0 0.0
    %524 = vmatpush1.msra.mxu0 0.0
    %525 = vmatprep.subr.mxu0 0.0
    %526 = vmatpush1.msra.mxu0 0.0
    %527 = vmatprep.subr.mxu0 0.0
    %528 = vmatpush1.msra.mxu0 0.0
    %529 = vmatprep.subr.mxu0 0.0
    %530 = vmatpush1.msra.mxu0 0.0
    %531 = vmatprep.subr.mxu0 0.0
    %532 = vmatpush1.msra.mxu0 0.0
    %533 = vmatprep.mubr.f32.mxu0 0.0
    %534 = vmatmul.mubr.f32.gmra.mrb[0].mxu0 %v467
    %v535 = vpop.f32.mrb[0].mxu0
    %v536 = vadd.f32 0.0, %v535
    %v537 = vpop.f32.mrb[0].mxu0
    %538 = vdwg.mxu0
    %v539 = vmax.f32 %v536, 0.0
    %vm540 = vcmask 31744
    %v542 = vsel %vm540, %v539, 0
    %vm544 = vcmask 1043456
    %v546 = vsel %vm544, %v185, 0
    %548 = vmatprep.subr.mxu0 0.0
    %549 = vmatpush1.msra.mxu0 %v546
    %550 = vmatprep.subr.mxu0 0.0
    %551 = vmatpush1.msra.mxu0 0.0
    %552 = vmatprep.subr.mxu0 0.0
    %553 = vmatpush1.msra.mxu0 0.0
    %554 = vmatprep.subr.mxu0 0.0
    %555 = vmatpush1.msra.mxu0 0.0
    %556 = vmatprep.subr.mxu0 0.0
    %557 = vmatpush1.msra.mxu0 0.0
    %558 = vmatprep.subr.mxu0 0.0
    %559 = vmatpush1.msra.mxu0 0.0
    %560 = vmatprep.subr.mxu0 0.0
    %561 = vmatpush1.msra.mxu0 0.0
    %562 = vmatprep.subr.mxu0 0.0
    %563 = vmatpush1.msra.mxu0 0.0
    %564 = vmatprep.subr.mxu0 0.0
    %565 = vmatpush1.msra.mxu0 0.0
    %566 = vmatprep.subr.mxu0 0.0
    %567 = vmatpush1.msra.mxu0 0.0
    %568 = vmatprep.subr.mxu0 0.0
    %569 = vmatpush1.msra.mxu0 0.0
    %570 = vmatprep.subr.mxu0 0.0
    %571 = vmatpush1.msra.mxu0 0.0
    %572 = vmatprep.subr.mxu0 0.0
    %573 = vmatpush1.msra.mxu0 0.0
    %574 = vmatprep.subr.mxu0 0.0
    %575 = vmatpush1.msra.mxu0 0.0
    %576 = vmatprep.subr.mxu0 0.0
    %577 = vmatpush1.msra.mxu0 0.0
    %578 = vmatprep.subr.mxu0 0.0
    %579 = vmatpush1.msra.mxu0 0.0
    %580 = vmatprep.subr.mxu0 0.0
    %581 = vmatpush1.msra.mxu0 0.0
    %582 = vmatprep.subr.mxu0 0.0
    %583 = vmatpush1.msra.mxu0 0.0
    %584 = vmatprep.subr.mxu0 0.0
    %585 = vmatpush1.msra.mxu0 0.0
    %586 = vmatprep.subr.mxu0 0.0
    %587 = vmatpush1.msra.mxu0 0.0
    %588 = vmatprep.subr.mxu0 0.0
    %589 = vmatpush1.msra.mxu0 0.0
    %590 = vmatprep.subr.mxu0 0.0
    %591 = vmatpush1.msra.mxu0 0.0
    %592 = vmatprep.subr.mxu0 0.0
    %593 = vmatpush1.msra.mxu0 0.0
    %594 = vmatprep.subr.mxu0 0.0
    %595 = vmatpush1.msra.mxu0 0.0
    %596 = vmatprep.subr.mxu0 0.0
    %597 = vmatpush1.msra.mxu0 0.0
    %598 = vmatprep.subr.mxu0 0.0
    %599 = vmatpush1.msra.mxu0 0.0
    %600 = vmatprep.subr.mxu0 0.0
    %601 = vmatpush1.msra.mxu0 0.0
    %602 = vmatprep.subr.mxu0 0.0
    %603 = vmatpush1.msra.mxu0 0.0
    %604 = vmatprep.subr.mxu0 0.0
    %605 = vmatpush1.msra.mxu0 0.0
    %606 = vmatprep.subr.mxu0 0.0
    %607 = vmatpush1.msra.mxu0 0.0
    %608 = vmatprep.subr.mxu0 0.0
    %609 = vmatpush1.msra.mxu0 0.0
    %610 = vmatprep.subr.mxu0 0.0
    %611 = vmatpush1.msra.mxu0 0.0
    %612 = vmatprep.mubr.f32.mxu0 0.0
    %613 = vmatmul.mubr.f32.gmra.mrb[0].mxu0 %v542
    %v614 = vpop.f32.mrb[0].mxu0
    %v615 = vadd.f32 0.0, %v614
    %v616 = vpop.f32.mrb[0].mxu0
    %617 = vdwg.mxu0
    %v619 = vsel %vm540, %v371, 0
    %621 = vmatprep.subr.mxu0 0.0
    %622 = vmatpush1.msra.mxu0 %v546
    %623 = vmatprep.subr.mxu0 0.0
    %624 = vmatpush1.msra.mxu0 0.0
    %625 = vmatprep.subr.mxu0 0.0
    %626 = vmatpush1.msra.mxu0 0.0
    %627 = vmatprep.subr.mxu0 0.0
    %628 = vmatpush1.msra.mxu0 0.0
    %629 = vmatprep.subr.mxu0 0.0
    %630 = vmatpush1.msra.mxu0 0.0
    %631 = vmatprep.subr.mxu0 0.0
    %632 = vmatpush1.msra.mxu0 0.0
    %633 = vmatprep.subr.mxu0 0.0
    %634 = vmatpush1.msra.mxu0 0.0
    %635 = vmatprep.subr.mxu0 0.0
    %636 = vmatpush1.msra.mxu0 0.0
    %637 = vmatprep.subr.mxu0 0.0
    %638 = vmatpush1.msra.mxu0 0.0
    %639 = vmatprep.subr.mxu0 0.0
    %640 = vmatpush1.msra.mxu0 0.0
    %641 = vmatprep.subr.mxu0 0.0
    %642 = vmatpush1.msra.mxu0 0.0
    %643 = vmatprep.subr.mxu0 0.0
    %644 = vmatpush1.msra.mxu0 0.0
    %645 = vmatprep.subr.mxu0 0.0
    %646 = vmatpush1.msra.mxu0 0.0
    %647 = vmatprep.subr.mxu0 0.0
    %648 = vmatpush1.msra.mxu0 0.0
    %649 = vmatprep.subr.mxu0 0.0
    %650 = vmatpush1.msra.mxu0 0.0
    %651 = vmatprep.subr.mxu0 0.0
    %652 = vmatpush1.msra.mxu0 0.0
    %653 = vmatprep.subr.mxu0 0.0
    %654 = vmatpush1.msra.mxu0 0.0
    %655 = vmatprep.subr.mxu0 0.0
    %656 = vmatpush1.msra.mxu0 0.0
    %657 = vmatprep.subr.mxu0 0.0
    %658 = vmatpush1.msra.mxu0 0.0
    %659 = vmatprep.subr.mxu0 0.0
    %660 = vmatpush1.msra.mxu0 0.0
    %661 = vmatprep.subr.mxu0 0.0
    %662 = vmatpush1.msra.mxu0 0.0
    %663 = vmatprep.subr.mxu0 0.0
    %664 = vmatpush1.msra.mxu0 0.0
    %665 = vmatprep.subr.mxu0 0.0
    %666 = vmatpush1.msra.mxu0 0.0
    %667 = vmatprep.subr.mxu0 0.0
    %668 = vmatpush1.msra.mxu0 0.0
    %669 = vmatprep.subr.mxu0 0.0
    %670 = vmatpush1.msra.mxu0 0.0
    %671 = vmatprep.subr.mxu0 0.0
    %672 = vmatpush1.msra.mxu0 0.0
    %673 = vmatprep.subr.mxu0 0.0
    %674 = vmatpush1.msra.mxu0 0.0
    %675 = vmatprep.subr.mxu0 0.0
    %676 = vmatpush1.msra.mxu0 0.0
    %677 = vmatprep.subr.mxu0 0.0
    %678 = vmatpush1.msra.mxu0 0.0
    %679 = vmatprep.subr.mxu0 0.0
    %680 = vmatpush1.msra.mxu0 0.0
    %681 = vmatprep.subr.mxu0 0.0
    %682 = vmatpush1.msra.mxu0 0.0
    %683 = vmatprep.subr.mxu0 0.0
    %684 = vmatpush1.msra.mxu0 0.0
    %685 = vmatprep.mubr.f32.mxu0 0.0
    %686 = vmatmul.mubr.f32.gmra.mrb[0].mxu0 %v619
    %v687 = vpop.f32.mrb[0].mxu0
    %v688 = vadd.f32 %v615, %v687
    %v689 = vpop.f32.mrb[0].mxu0
    %690 = vdwg.mxu0
    %v691 = vxor.u32 %v688, 2147483648
    %v692 = vmul.f32 %v691, 1.442695
    %v693 = vpow.pop %v692
    %v694 = vadd.f32 %v693, 1.0
    %v695 = vrcp.pop %v694
    %v696 = vmul.f32 1.0, %v695
    %vm697 = vcmask 517120
    %698 = vst.msk [vmem:[#allocation5] sm:$0x3] %vm697, %v696
    %v699 = vlaneseq
    %v700 = vshrl.u32 %v699, 7
    %v701 = vsub.s32 0, %v700
    %v702 = vrot.slane %v696, %v701
    %704 = vbcast.lane.b32.xlu0 %v702, 256
    %v705 = vpop.permute.xlu0 %704
    %s707 = sor.u32 256, 8
    %708 = vbcast.lane.b32.xlu0 %v702, %s707
    %v709 = vpop.permute.xlu0 %708
    %s711 = sor.u32 256, 16
    %712 = vbcast.lane.b32.xlu0 %v702, %s711
    %v713 = vpop.permute.xlu0 %712
    %s715 = sor.u32 256, 24
    %716 = vbcast.lane.b32.xlu0 %v702, %s715
    %v717 = vpop.permute.xlu0 %716
    %s719 = sor.u32 256, 32
    %720 = vbcast.lane.b32.xlu0 %v702, %s719
    %v721 = vpop.permute.xlu0 %720
    %s723 = sor.u32 256, 40
    %724 = vbcast.lane.b32.xlu0 %v702, %s723
    %v725 = vpop.permute.xlu0 %724
    %s727 = sor.u32 256, 48
    %728 = vbcast.lane.b32.xlu0 %v702, %s727
    %v729 = vpop.permute.xlu0 %728
    %s731 = sor.u32 256, 56
    %732 = vbcast.lane.b32.xlu0 %v702, %s731
    %v733 = vpop.permute.xlu0 %732
    %v734 = vlaneseq
    %v735 = vshrl.u32 %v734, 7
    %v736 = vsub.s32 1, %v735
    %v737 = vrot.slane %v696, %v736
    %739 = vbcast.lane.b32.xlu0 %v737, 256
    %v740 = vpop.permute.xlu0 %739
    %s742 = sor.u32 256, 8
    %743 = vbcast.lane.b32.xlu0 %v737, %s742
    %v744 = vpop.permute.xlu0 %743
    %s746 = sor.u32 256, 16
    %747 = vbcast.lane.b32.xlu0 %v737, %s746
    %v748 = vpop.permute.xlu0 %747
    %s750 = sor.u32 256, 24
    %751 = vbcast.lane.b32.xlu0 %v737, %s750
    %v752 = vpop.permute.xlu0 %751
    %s754 = sor.u32 256, 32
    %755 = vbcast.lane.b32.xlu0 %v737, %s754
    %v756 = vpop.permute.xlu0 %755
    %s758 = sor.u32 256, 40
    %759 = vbcast.lane.b32.xlu0 %v737, %s758
    %v760 = vpop.permute.xlu0 %759
    %s762 = sor.u32 256, 48
    %763 = vbcast.lane.b32.xlu0 %v737, %s762
    %v764 = vpop.permute.xlu0 %763
    %s766 = sor.u32 256, 56
    %767 = vbcast.lane.b32.xlu0 %v737, %s766
    %v768 = vpop.permute.xlu0 %767
    %v769 = vmul.f32 %v32, %v705
    %v770 = vmul.f32 %v33, %v705
    %v771 = vmul.f32 %v34, %v709
    %v772 = vmul.f32 %v35, %v709
    %v773 = vmul.f32 %v36, %v713
    %v774 = vmul.f32 %v37, %v713
    %v775 = vmul.f32 %v38, %v717
    %v776 = vmul.f32 %v39, %v717
    %v777 = vmul.f32 %v40, %v721
    %v778 = vmul.f32 %v41, %v721
    %v779 = vmul.f32 %v42, %v725
    %v780 = vmul.f32 %v43, %v725
    %v781 = vmul.f32 %v44, %v729
    %v782 = vmul.f32 %v45, %v729
    %v783 = vmul.f32 %v46, %v733
    %v784 = vmul.f32 %v47, %v733
    %v785 = vmul.f32 %v48, %v740
    %v786 = vmul.f32 %v49, %v740
    %v787 = vmul.f32 %v50, %v744
    %v788 = vmul.f32 %v51, %v744
    %v789 = vmul.f32 %v52, %v748
    %v790 = vmul.f32 %v53, %v748
    %v791 = vmul.f32 %v54, %v752
    %v792 = vmul.f32 %v55, %v752
    %v793 = vmul.f32 %v56, %v756
    %v794 = vmul.f32 %v57, %v756
    %v795 = vmul.f32 %v58, %v760
    %v796 = vmul.f32 %v59, %v760
    %v797 = vmul.f32 %v60, %v764
    %v798 = vmul.f32 %v61, %v764
    %v799 = vmul.f32 %v62, %v768
    %v800 = vmul.f32 %v63, %v768
    %801 = vst [vmem:[#allocation6] sm:$0xff] %v769
    %802 = vst [vmem:[#allocation6 + $0x8] sm:$0xff] %v770
    %803 = vst [vmem:[#allocation6 + $0x10] sm:$0xff] %v771
    %804 = vst [vmem:[#allocation6 + $0x18] sm:$0xff] %v772
    %805 = vst [vmem:[#allocation6 + $0x20] sm:$0xff] %v773
    %806 = vst [vmem:[#allocation6 + $0x28] sm:$0xff] %v774
    %807 = vst [vmem:[#allocation6 + $0x30] sm:$0xff] %v775
    %808 = vst [vmem:[#allocation6 + $0x38] sm:$0xff] %v776
    %809 = vst [vmem:[#allocation6 + $0x40] sm:$0xff] %v777
    %810 = vst [vmem:[#allocation6 + $0x48] sm:$0xff] %v778
    %811 = vst [vmem:[#allocation6 + $0x50] sm:$0xff] %v779
    %812 = vst [vmem:[#allocation6 + $0x58] sm:$0xff] %v780
    %813 = vst [vmem:[#allocation6 + $0x60] sm:$0xff] %v781
    %814 = vst [vmem:[#allocation6 + $0x68] sm:$0xff] %v782
    %815 = vst [vmem:[#allocation6 + $0x70] sm:$0xff] %v783
    %816 = vst [vmem:[#allocation6 + $0x78] sm:$0xff] %v784
    %817 = vst [vmem:[#allocation6 + $0x80] sm:$0xff] %v785
    %818 = vst [vmem:[#allocation6 + $0x88] sm:$0xff] %v786
    %819 = vst [vmem:[#allocation6 + $0x90] sm:$0xff] %v787
    %820 = vst [vmem:[#allocation6 + $0x98] sm:$0xff] %v788
    %821 = vst [vmem:[#allocation6 + $0xa0] sm:$0xff] %v789
    %822 = vst [vmem:[#allocation6 + $0xa8] sm:$0xff] %v790
    %823 = vst [vmem:[#allocation6 + $0xb0] sm:$0xff] %v791
    %824 = vst [vmem:[#allocation6 + $0xb8] sm:$0xff] %v792
    %825 = vst [vmem:[#allocation6 + $0xc0] sm:$0xff] %v793
    %826 = vst [vmem:[#allocation6 + $0xc8] sm:$0xff] %v794
    %827 = vst [vmem:[#allocation6 + $0xd0] sm:$0xff] %v795
    %828 = vst [vmem:[#allocation6 + $0xd8] sm:$0xff] %v796
    %829 = vst [vmem:[#allocation6 + $0xe0] sm:$0xff] %v797
    %830 = vst [vmem:[#allocation6 + $0xe8] sm:$0xff] %v798
    %831 = vst [vmem:[#allocation6 + $0xf0] sm:$0xff] %v799
    %832 = vst [vmem:[#allocation6 + $0xf8] sm:$0xff] %v800
    // Predicated region
    $region18: #{tpu_custom_call.1} parent=1 // pred_check
      _
    $region19: #{tpu_custom_call.1} parent=1 // pred_check_branch
      %834 = sbr.rel (0) target = $region21
    $region20: #{tpu_custom_call.1} parent=1 // pred_region
      %s836 = ssub.s32 32, 32
      %837 = vsyncadd [#allocation4], %s836
      %s839 = sshll.u32 [#allocation5], 4
      %s840 = int_to_ptr.vmem [resolvable:$true] %s839
      %842 = dma.vmem_to_hbm [thread:$0]  %s840, 32, %s3, [#allocation4]
    $region21: #{tpu_custom_call.1} parent=1 // pred_fallthru
      _
    // Predicated region
    $region22: #{tpu_custom_call.1} parent=1 // pred_check
      _
    $region23: #{tpu_custom_call.1} parent=1 // pred_check_branch
      %844 = sbr.rel (0) target = $region25
    $region24: #{tpu_custom_call.1} parent=1 // pred_region
      %s846 = ssub.s32 4096, 4096
      %847 = vsyncadd [#allocation7], %s846
      %s848 = sshll.u32 [#allocation6], 4
      %s849 = int_to_ptr.vmem [resolvable:$true] %s848
      %854 = dma.vmem_to_hbm [thread:$0]  %s849, 4096, %s4, [#allocation7], 256, 256, 16
    $region25: #{tpu_custom_call.1} parent=1 // pred_fallthru
      _
    // Predicated region
    $region26: #{tpu_custom_call.1} parent=1 // pred_check
      _
    $region27: #{tpu_custom_call.1} parent=1 // pred_check_branch
      %856 = sbr.rel (0) target = $region29
    $region28: #{tpu_custom_call.1} parent=1 // pred_region
      %857 = dma.done [#allocation4], 32
    $region29: #{tpu_custom_call.1} parent=1 // pred_fallthru
      _
    // Predicated region
    $region30: #{tpu_custom_call.1} parent=1 // pred_check
      _
    $region31: #{tpu_custom_call.1} parent=1 // pred_check_branch
      %859 = sbr.rel (0) target = $region33
    $region32: #{tpu_custom_call.1} parent=1 // pred_region
      %860 = dma.done [#allocation7], 4096
    $region33: #{tpu_custom_call.1} parent=1 // pred_fallthru
      _
    %861 = vsyncpa [#allocation3], 1
    %862 = vsyncpa [#allocation4], 1
    %863 = vsyncpa [#allocation7], 1

</llo_original>
